<compile_context>
chip_gen: v7x
topology: tpu7x:2x2x1
jax: 0.10.0
libtpu: 0.0.40
codegen_flags: <defaults>
</compile_context>

<pallas_src>
import jax
import jax.numpy as jnp
from jax.experimental import pallas as pl
from jax.experimental.pallas import tpu as pltpu


# --------------------------------------------------------------------------
# Pallas kernels
# --------------------------------------------------------------------------

def _text_to_filters_kernel(t_ref, pw_ref, pb_ref, fw_ref, fb_ref, o_ref):
    # Fused projector (nn.Linear) + MultimodalEncoder filter generation.
    # t:(B,hid) pw:(hid,hid) pb:(1,hid) fw:(hid,C*K) fb:(1,C*K) -> o:(B,C*K) bf16
    t = jnp.dot(t_ref[...], pw_ref[...],
                preferred_element_type=jnp.float32) + pb_ref[...]
    f = jnp.dot(t, fw_ref[...],
                preferred_element_type=jnp.float32) + fb_ref[...]
    o_ref[...] = f.astype(o_ref.dtype)


def pallas_text_to_filters(txt, pw, pb, fw, fb):
    """Fused projector + filter generator. txt:(B,hid) -> (B, C*K) bf16 (C-major)."""
    B = txt.shape[0]
    N = fw.shape[1]
    return pl.pallas_call(
        _text_to_filters_kernel,
        out_shape=jax.ShapeDtypeStruct((B, N), jnp.bfloat16),
    )(txt, pw, pb, fw, fb)


def _dynconv_locate_kernel(x_ref, f_ref, lw_ref, lb_ref, o_ref):
    # Per-batch text-conditioned dynamic 1x1 conv + ReLU, fused with locate_net
    # (1x1 conv, lane-padded) and the channel concat -> one lane-dense store.
    # x:(1,HW,C) bf16  f:(1,C,K) bf16  lw:(K,P) bf16  lb:(1,P) f32  o:(1,HW,K+P) f32
    joint = jnp.maximum(
        jnp.dot(x_ref[0], f_ref[0], preferred_element_type=jnp.float32), 0.0)
    loc = jnp.dot(joint.astype(jnp.bfloat16), lw_ref[...],
                  preferred_element_type=jnp.float32) + lb_ref[...]
    o_ref[0] = jnp.concatenate([joint, loc], axis=-1)


def pallas_dynconv_locate(x_flat, filters, loc_w, loc_b):
    """x:(B,HW,C) bf16, filters:(B,C,K) bf16 -> (B,HW,K+P) f32.

    Channels [0,K): relu(dynamic 1x1 conv); channel K: locate_net output;
    channels >K: exactly zero (lane padding so downstream convs stay unmasked).
    """
    B, HW, C = x_flat.shape
    K = filters.shape[2]
    P = loc_w.shape[1]
    return pl.pallas_call(
        _dynconv_locate_kernel,
        out_shape=jax.ShapeDtypeStruct((B, HW, K + P), jnp.float32),
        grid=(B,),
        in_specs=[
            pl.BlockSpec((1, HW, C), lambda i: (i, 0, 0)),
            pl.BlockSpec((1, C, K), lambda i: (i, 0, 0)),
            pl.BlockSpec((K, P), lambda i: (0, 0)),
            pl.BlockSpec((1, P), lambda i: (0, 0)),
        ],
        out_specs=pl.BlockSpec((1, HW, K + P), lambda i: (i, 0, 0)),
        compiler_params=pltpu.CompilerParams(
            dimension_semantics=("parallel",)),
    )(x_flat, filters, loc_w, loc_b)


def _nearest_up2(x):
    # Nearest-neighbour 2x spatial upsample, written explicitly as
    # broadcast + leading-dim-collapse reshapes (lane dim untouched).
    H, W, C = x.shape
    u = jnp.broadcast_to(x[:, None, :, :], (H, 2, W, C)).reshape(2 * H, W, C)
    u = jnp.broadcast_to(u[:, :, None, :], (2 * H, W, 2, C)).reshape(2 * H, 2 * W, C)
    return u


def _up2_conv3x3_patches(x):
    # im2col matrix of conv3x3(pad=1)(nearest_up2(x)), built entirely in VMEM:
    # the 4x-larger upsampled tensor never goes through HBM, and the 9 taps are
    # lane-concatenated so the conv is ONE K=9*Cin MXU contraction.
    H, W, Cin = x.shape
    Ho, Wo = 2 * H, 2 * W
    u = _nearest_up2(x)                                         # (Ho, Wo, Cin)
    zr = jnp.zeros((1, Wo, Cin), x.dtype)
    u = jnp.concatenate([zr, u, zr], axis=0)                    # (Ho+2, Wo, Cin)
    zc = jnp.zeros((Ho + 2, 1, Cin), x.dtype)
    u = jnp.concatenate([zc, u, zc], axis=1)                    # (Ho+2, Wo+2, Cin)
    taps = [u[dy:dy + Ho, dx:dx + Wo, :]
            for dy in range(3) for dx in range(3)]
    p = jnp.concatenate(taps, axis=-1)                          # (Ho, Wo, 9*Cin)
    return p.reshape(Ho * Wo, 9 * Cin).astype(jnp.bfloat16)


def _up2_conv3x3_relu_kernel(x_ref, w_ref, b_ref, o_ref):
    # x:(1,H,W,Cin) f32  w:(9*Cin,Cout) bf16  b:(1,Cout) f32  o:(1,4HW,Cout) f32
    p = _up2_conv3x3_patches(x_ref[0])
    y = jnp.dot(p, w_ref[...], preferred_element_type=jnp.float32) + b_ref[...]
    o_ref[0] = jnp.maximum(y, 0.0)


def _up2_conv3x3_relu_final_kernel(x_ref, w_ref, b_ref, fw_ref, fb_ref, o_ref):
    # Same as above, with the final 1x1 mask conv fused as an epilogue matmul.
    # fw:(Cout,Fp) bf16 (only column 0 non-zero)  fb:(1,Fp) f32  o:(1,4HW,Fp) f32
    p = _up2_conv3x3_patches(x_ref[0])
    y = jnp.maximum(
        jnp.dot(p, w_ref[...], preferred_element_type=jnp.float32) + b_ref[...],
        0.0)
    m = jnp.dot(y.astype(jnp.bfloat16), fw_ref[...],
                preferred_element_type=jnp.float32) + fb_ref[...]
    o_ref[0] = m


# TODO(synk): at real segmentation resolutions these conv kernels should be
# row-tiled with a 1-row halo (and vmem_limit_bytes set) instead of taking the
# whole image per grid step; at the toy shapes here a whole-image block is fine.

def pallas_up2_conv3x3_relu(x_nhwc, w9, b):
    """relu(conv3x3(pad1(nearest_up2(x)))), x:(B,H,W,Cin) f32 -> (B,2H,2W,Cout) f32."""
    B, H, W, Cin = x_nhwc.shape
    Cout = w9.shape[1]
    Ho, Wo = 2 * H, 2 * W
    out = pl.pallas_call(
        _up2_conv3x3_relu_kernel,
        out_shape=jax.ShapeDtypeStruct((B, Ho * Wo, Cout), jnp.float32),
        grid=(B,),
        in_specs=[
            pl.BlockSpec((1, H, W, Cin), lambda i: (i, 0, 0, 0)),
            pl.BlockSpec((9 * Cin, Cout), lambda i: (0, 0)),
            pl.BlockSpec((1, Cout), lambda i: (0, 0)),
        ],
        out_specs=pl.BlockSpec((1, Ho * Wo, Cout), lambda i: (i, 0, 0)),
        compiler_params=pltpu.CompilerParams(
            dimension_semantics=("parallel",)),
    )(x_nhwc, w9, b)
    return out.reshape(B, Ho, Wo, Cout)


def pallas_up2_conv3x3_relu_final(x_nhwc, w9, b, fw, fb):
    """Last head layer fused with the final 1x1 mask conv. Returns (B,2H,2W,Fp)."""
    B, H, W, Cin = x_nhwc.shape
    Cout = w9.shape[1]
    Fp = fw.shape[1]
    Ho, Wo = 2 * H, 2 * W
    out = pl.pallas_call(
        _up2_conv3x3_relu_final_kernel,
        out_shape=jax.ShapeDtypeStruct((B, Ho * Wo, Fp), jnp.float32),
        grid=(B,),
        in_specs=[
            pl.BlockSpec((1, H, W, Cin), lambda i: (i, 0, 0, 0)),
            pl.BlockSpec((9 * Cin, Cout), lambda i: (0, 0)),
            pl.BlockSpec((1, Cout), lambda i: (0, 0)),
            pl.BlockSpec((Cout, Fp), lambda i: (0, 0)),
            pl.BlockSpec((1, Fp), lambda i: (0, 0)),
        ],
        out_specs=pl.BlockSpec((1, Ho * Wo, Fp), lambda i: (i, 0, 0)),
        compiler_params=pltpu.CompilerParams(
            dimension_semantics=("parallel",)),
    )(x_nhwc, w9, b, fw, fb)
    return out.reshape(B, Ho, Wo, Fp)


# --------------------------------------------------------------------------
# Model (parameters + forward glue)
# --------------------------------------------------------------------------

class SegmentationModelPallas:
    NUM_CLASSES = 1
    _CLS_PAD = 8   # lane-pad the single mask class so the final store is not width-1

    def __init__(self, key, *, num_channels=32, hidden_size=32,
                 num_kernels=16, num_downsample=2, vocab_size=50,
                 head_channels=8):
        self.num_channels = num_channels          # image_encoder.num_channels
        self.hidden_size = hidden_size            # text_encoder.hidden_size
        self.num_kernels = num_kernels            # multimodal_encoder num_kernels
        self.num_downsample = num_downsample      # image_encoder.num_downsample
        self.head_channels = head_channels
        self.locate_then_segment = True           # config['locate_then_segment']

        C, K, hid = num_channels, num_kernels, hidden_size
        # joint(+loc) channel count padded to a multiple of 8; extra channels are
        # exactly zero (zero weights + zero bias in the locate pad columns).
        self.joint_channels = ((K + 1 + 7) // 8) * 8
        loc_pad = self.joint_channels - K

        ks = jax.random.split(key, 8 + 2 * num_downsample)
        s = 0.1
        # TODO(synk): original text_encoder class is eval'd from config (an LSTM in
        # bvpr) and is not defined here; approximated by embedding + masked
        # mean-pool, with process_hidden == identity.
        self.embedding = s * jax.random.normal(ks[0], (vocab_size, hid), jnp.float32)

        # projector = nn.Linear(hidden_size, hidden_size) — fused with filter gen.
        self.proj_w = s * jax.random.normal(ks[1], (hid, hid), jnp.float32)
        self.proj_b = (s * jax.random.normal(ks[2], (hid,), jnp.float32)).reshape(1, hid)
        # MultimodalEncoder filter generator: canonical (hid, K, C) weights stored
        # C-major so the dynamic conv is (HW,C)@(C,K) with no in-kernel transpose.
        filt_w = s * jax.random.normal(ks[3], (hid, K, C), jnp.float32)
        filt_b = s * jax.random.normal(ks[4], (K, C), jnp.float32)
        self.filt_w = jnp.transpose(filt_w, (0, 2, 1)).reshape(hid, C * K)
        self.filt_b = jnp.transpose(filt_b, (1, 0)).reshape(1, C * K)

        # locate_net = nn.Conv2d(num_kernels, 1, 1, 1, 0), lane-padded (cols >=1 zero).
        loc_w = s * jax.random.normal(ks[5], (K, 1), jnp.float32)
        loc_b = s * jax.random.normal(ks[6], (1,), jnp.float32)
        self.loc_w = jnp.pad(loc_w, ((0, 0), (0, loc_pad - 1))).astype(jnp.bfloat16)
        self.loc_b = jnp.pad(loc_b.reshape(1, 1), ((0, 0), (0, loc_pad - 1)))

        # MaskPredictor: num_downsample x (2x nearest up -> conv3x3 -> ReLU), then a
        # final 1x1 conv to NUM_CLASSES (fused into the last conv kernel).
        # Weights stored pre-padded/reshaped to (9*Cin_pad, Cout) and pre-cast bf16.
        # TODO(synk): ASPPHead variant, BatchNorm and multiscale outputs omitted.
        in_ch_true = K + 1                        # +1 from locate_then_segment concat
        in_ch_pad = self.joint_channels
        self.head_convs = []
        kidx = 7
        for _ in range(num_downsample):
            w = s * jax.random.normal(ks[kidx], (3, 3, in_ch_true, head_channels),
                                      jnp.float32)
            b = s * jax.random.normal(ks[kidx + 1], (head_channels,), jnp.float32)
            w = jnp.pad(w, ((0, 0), (0, 0), (0, in_ch_pad - in_ch_true), (0, 0)))
            w9 = w.reshape(9 * in_ch_pad, head_channels).astype(jnp.bfloat16)
            self.head_convs.append((w9, b.reshape(1, head_channels)))
            in_ch_true = head_channels
            in_ch_pad = head_channels
            kidx += 2
        fw = s * jax.random.normal(ks[kidx], (head_channels, self.NUM_CLASSES),
                                   jnp.float32)
        fb = jnp.zeros((self.NUM_CLASSES,), jnp.float32)
        self.final_w = jnp.pad(
            fw, ((0, 0), (0, self._CLS_PAD - self.NUM_CLASSES))).astype(jnp.bfloat16)
        self.final_b = jnp.pad(
            fb, (0, self._CLS_PAD - self.NUM_CLASSES)).reshape(1, self._CLS_PAD)

    def forward(self, image, text, size=None, text_l=None):
        # image: NCHW precomputed visual features (C != 3 branch of the reference).
        B, C, H, W = image.shape
        assert C != 3 and C == self.num_channels
        N = 2 ** self.num_downsample
        image_size = (B, 3, N * H, N * W)         # as in the reference C != 3 branch

        # ---- text encoder + process_hidden (XLA glue; see TODO in __init__) ----
        L = text.shape[1]
        emb = self.embedding[text]                                    # (B,L,hid)
        lens = jnp.maximum(text_l.astype(jnp.float32), 1.0)
        mask = (jnp.arange(L)[None, :] < text_l[:, None]).astype(jnp.float32)
        txt = (emb * mask[..., None]).sum(axis=1) / lens[:, None]     # (B,hid)

        # ---- fused projector + dynamic-filter generation (one Pallas call) ----
        filt = pallas_text_to_filters(txt, self.proj_w, self.proj_b,
                                      self.filt_w, self.filt_b)       # (B,C*K) bf16
        filt = filt.reshape(B, C, self.num_kernels)                   # (B,C,K)

        # ---- fused MultimodalEncoder dyn-1x1-conv + ReLU + locate_net ----
        x_flat = jnp.transpose(image, (0, 2, 3, 1)).reshape(B, H * W, C)
        x_flat = x_flat.astype(jnp.bfloat16)
        joint_loc = pallas_dynconv_locate(x_flat, filt, self.loc_w, self.loc_b)
        K = self.num_kernels
        loc = joint_loc[:, :, K:K + 1].reshape(B, H, W, 1)            # locate output
        x = joint_loc.reshape(B, H, W, self.joint_channels)           # joint ++ loc ++ 0s

        # ---- mask predictor: fused (up2x + conv3x3 + ReLU) per layer; the final
        # 1x1 mask conv is fused into the last layer's kernel ----
        for (w9, b) in self.head_convs[:-1]:
            x = pallas_up2_conv3x3_relu(x, w9, b)
        w9, b = self.head_convs[-1]
        mask = pallas_up2_conv3x3_relu_final(x, w9, b, self.final_w, self.final_b)
        mask = mask[..., :self.NUM_CLASSES]                           # (B,Hh,Wh,1)
        assert mask.shape[1:3] == (image_size[2], image_size[3])

        # back to NCHW for the outputs, matching PyTorch
        loc_nchw = jnp.transpose(loc, (0, 3, 1, 2))
        mask_nchw = jnp.transpose(mask, (0, 3, 1, 2))
        return [loc_nchw, mask_nchw]              # outputs = [loc] + [mask]


# --------------------------------------------------------------------------
# Driver
# --------------------------------------------------------------------------

if __name__ == "__main__":
    key = jax.random.PRNGKey(0)
    k_img, k_txt, k_par = jax.random.split(key, 3)

    B, C, H, W = 2, 32, 8, 8        # precomputed visual features (C != 3 branch)
    L, vocab = 8, 50

    image = jax.random.normal(k_img, (B, C, H, W), jnp.float32)
    text = jax.random.randint(k_txt, (B, L), 0, vocab, jnp.int32)
    text_l = jnp.array([8, 5], jnp.int32)

    model = SegmentationModelPallas(k_par, num_channels=C, hidden_size=32,
                                    num_kernels=16, num_downsample=2,
                                    vocab_size=vocab, head_channels=8)

    outputs = model.forward(image, text, size=None, text_l=text_l)
    outputs = [jax.block_until_ready(o) for o in outputs]

    assert outputs[0].shape == (B, 1, H, W)
    assert outputs[1].shape == (B, 1, 4 * H, 4 * W)
    assert all(bool(jnp.all(jnp.isfinite(o))) for o in outputs)
    print("KERNEL_OK")
</pallas_src>

<mosaic_0001>
module attributes {stable_mosaic.version = 11 : i64} {
  func.func @_text_to_filters_kernel(%arg0: memref<2x32xf32, #tpu.memory_space<vmem>>, %arg1: memref<32x32xf32, #tpu.memory_space<vmem>>, %arg2: memref<1x32xf32, #tpu.memory_space<vmem>>, %arg3: memref<32x512xf32, #tpu.memory_space<vmem>>, %arg4: memref<1x512xf32, #tpu.memory_space<vmem>>, %arg5: memref<2x512xbf16, #tpu.memory_space<vmem>>) attributes {dimension_semantics = [], scalar_prefetch = 0 : i64, scratch_operands = 0 : i64, tpu.core_type = #tpu.core_type<tc>} {
    %c0 = arith.constant 0 : index
    %c0_0 = arith.constant 0 : index
    %0 = vector.load %arg0[%c0, %c0_0] : memref<2x32xf32, #tpu.memory_space<vmem>>, vector<2x32xf32>
    %c0_1 = arith.constant 0 : index
    %c0_2 = arith.constant 0 : index
    %1 = vector.load %arg1[%c0_1, %c0_2] : memref<32x32xf32, #tpu.memory_space<vmem>>, vector<32x32xf32>
    %cst = arith.constant dense<0.000000e+00> : vector<2x32xf32>
    %2 = tpu.matmul %0, %1, %cst {dimension_numbers = #tpu.dot_dimension_numbers<[1], [0], [0], [1], [0, 0, 1, 1], [], []>} : vector<2x32xf32>, vector<32x32xf32>, vector<2x32xf32> -> vector<2x32xf32>
    %c0_3 = arith.constant 0 : index
    %c0_4 = arith.constant 0 : index
    %3 = vector.load %arg2[%c0_3, %c0_4] : memref<1x32xf32, #tpu.memory_space<vmem>>, vector<1x32xf32>
    %4 = vector.broadcast %3 : vector<1x32xf32> to vector<2x32xf32>
    %5 = arith.addf %2, %4 : vector<2x32xf32>
    %c0_5 = arith.constant 0 : index
    %c0_6 = arith.constant 0 : index
    %6 = vector.load %arg3[%c0_5, %c0_6] : memref<32x512xf32, #tpu.memory_space<vmem>>, vector<32x512xf32>
    %cst_7 = arith.constant dense<0.000000e+00> : vector<2x512xf32>
    %7 = tpu.matmul %5, %6, %cst_7 {dimension_numbers = #tpu.dot_dimension_numbers<[1], [0], [0], [1], [0, 0, 1, 1], [], []>} : vector<2x32xf32>, vector<32x512xf32>, vector<2x512xf32> -> vector<2x512xf32>
    %c0_8 = arith.constant 0 : index
    %c0_9 = arith.constant 0 : index
    %8 = vector.load %arg4[%c0_8, %c0_9] : memref<1x512xf32, #tpu.memory_space<vmem>>, vector<1x512xf32>
    %9 = vector.broadcast %8 : vector<1x512xf32> to vector<2x512xf32>
    %10 = arith.addf %7, %9 : vector<2x512xf32>
    %11 = arith.truncf %10 : vector<2x512xf32> to vector<2x512xbf16>
    %c0_10 = arith.constant 0 : index
    %c0_11 = arith.constant 0 : index
    %12 = vector.load %arg5[%c0_10, %c0_11] : memref<2x512xbf16, #tpu.memory_space<vmem>>, vector<2x512xbf16>
    tpu.vector_store %arg5[%c0_10, %c0_11], %11 {strides = array<i32>} : memref<2x512xbf16, #tpu.memory_space<vmem>>, vector<2x512xbf16>,
    return
  }
}

</mosaic_0001>

<llo_original>
// kernel: tpu_custom_call.1
$region0: #{tpu_custom_call.1}
  #allocation0 [shape = 'u32[]', space=smem, size = 0x4, offset = 0x4, fixed_abs, tag = 'smem constant byte address 0x4 - core index']
  #allocation1 [shape = 'u32[144,128]{1,0:T(1,128)}', space=vmem, size = 0x12000, scoped, tag = 'internal scratch']
  %s0 = inlined_call_operand.hbm [shape: f32[2,32], index: 0, kind: input, shape index: {}]
  %s1 = inlined_call_operand.hbm [shape: f32[32,32], index: 1, kind: input, shape index: {}]
  %s2 = inlined_call_operand.vmem [shape: f32[1,32], index: 2, kind: input, shape index: {}]
  %s3 = inlined_call_operand.hbm [shape: f32[32,512], index: 3, kind: input, shape index: {}]
  %s4 = inlined_call_operand.vmem [shape: f32[1,512], index: 4, kind: input, shape index: {}]
  %s5 = inlined_call_operand.hbm [shape: bf16[2,512], index: 5, kind: output, shape index: {}]
  %s6 = sld [smem:[#allocation0]]
  $region42: #{tpu_custom_call.1} parent=0
    _
  %s8 = ssub.s32 1, %s6
  %s9 = scalar_select 0, %s8, %s6
  $region1: #{tpu_custom_call.1} parent=0
    #allocation2 [shape = 'u8[1024]{0}', space=vmem, size = 0x400, scoped, tag = 'input window, operand 0, single buffered']
    #allocation3 [shape = 's32[1]{0}', space=sflag, size = 0x4, scoped, tag = 'scoped memory for tpu_custom_call.1']
    #allocation4 [shape = 's32[1]{0}', space=sflag, size = 0x4, scoped, tag = 'scoped memory for tpu_custom_call.1']
    #allocation5 [shape = 'u8[16384]{0}', space=vmem, size = 0x4000, scoped, tag = 'input window, operand 1, single buffered']
    #allocation6 [shape = 's32[1]{0}', space=sflag, size = 0x4, scoped, tag = 'scoped memory for tpu_custom_call.1']
    #allocation7 [shape = 'u8[65536]{0}', space=vmem, size = 0x10000, scoped, tag = 'input window, operand 3, single buffered']
    #allocation8 [shape = 'u8[2048]{0}', space=vmem, size = 0x800, scoped, tag = 'output window, operand 0, single buffered']
    %10 = vsyncpa [#allocation3], 0
    %11 = vsyncpa [#allocation6], 0
    %12 = vsyncpa [#allocation4], 0
    // Predicated region
    $region2: #{tpu_custom_call.1} parent=1 // pred_check
      _
    $region3: #{tpu_custom_call.1} parent=1 // pred_check_branch
      %14 = sbr.rel (0) target = $region5
    $region4: #{tpu_custom_call.1} parent=1 // pred_region
      %s16 = ssub.s32 32, 32
      %17 = vsyncadd [#allocation3], %s16
      %s19 = sshll.u32 [#allocation2], 4
      %s20 = int_to_ptr.vmem [resolvable:$true] %s19
      %22 = dma.hbm_to_vmem [thread:$0]  %s0, 32, %s20, [#allocation3]
    $region5: #{tpu_custom_call.1} parent=1 // pred_fallthru
      _
    // Predicated region
    $region6: #{tpu_custom_call.1} parent=1 // pred_check
      _
    $region7: #{tpu_custom_call.1} parent=1 // pred_check_branch
      %24 = sbr.rel (0) target = $region9
    $region8: #{tpu_custom_call.1} parent=1 // pred_region
      %s26 = ssub.s32 512, 512
      %27 = vsyncadd [#allocation6], %s26
      %s28 = sshll.u32 [#allocation5], 4
      %s29 = int_to_ptr.vmem [resolvable:$true] %s28
      %34 = dma.hbm_to_vmem [thread:$0]  %s1, 512, %s29, [#allocation6], 128, 128, 8
    $region9: #{tpu_custom_call.1} parent=1 // pred_fallthru
      _
    // Predicated region
    $region10: #{tpu_custom_call.1} parent=1 // pred_check
      _
    $region11: #{tpu_custom_call.1} parent=1 // pred_check_branch
      %36 = sbr.rel (0) target = $region13
    $region12: #{tpu_custom_call.1} parent=1 // pred_region
      _
    $region13: #{tpu_custom_call.1} parent=1 // pred_fallthru
      _
    // Predicated region
    $region14: #{tpu_custom_call.1} parent=1 // pred_check
      _
    $region15: #{tpu_custom_call.1} parent=1 // pred_check_branch
      %38 = sbr.rel (0) target = $region17
    $region16: #{tpu_custom_call.1} parent=1 // pred_region
      %s40 = ssub.s32 2048, 2048
      %41 = vsyncadd [#allocation6], %s40
      %s42 = sshll.u32 [#allocation7], 4
      %s43 = int_to_ptr.vmem [resolvable:$true] %s42
      %48 = dma.hbm_to_vmem [thread:$0]  %s3, 2048, %s43, [#allocation6], 512, 512, 32
    $region17: #{tpu_custom_call.1} parent=1 // pred_fallthru
      _
    // Predicated region
    $region18: #{tpu_custom_call.1} parent=1 // pred_check
      _
    $region19: #{tpu_custom_call.1} parent=1 // pred_check_branch
      %50 = sbr.rel (0) target = $region21
    $region20: #{tpu_custom_call.1} parent=1 // pred_region
      _
    $region21: #{tpu_custom_call.1} parent=1 // pred_fallthru
      _
    // Predicated region
    $region22: #{tpu_custom_call.1} parent=1 // pred_check
      _
    $region23: #{tpu_custom_call.1} parent=1 // pred_check_branch
      %52 = sbr.rel (0) target = $region25
    $region24: #{tpu_custom_call.1} parent=1 // pred_region
      %53 = dma.done [#allocation3], 32
    $region25: #{tpu_custom_call.1} parent=1 // pred_fallthru
      _
    // Predicated region
    $region26: #{tpu_custom_call.1} parent=1 // pred_check
      _
    $region27: #{tpu_custom_call.1} parent=1 // pred_check_branch
      %55 = sbr.rel (0) target = $region29
    $region28: #{tpu_custom_call.1} parent=1 // pred_region
      %56 = dma.done [#allocation6], 512
    $region29: #{tpu_custom_call.1} parent=1 // pred_fallthru
      _
    // Predicated region
    $region30: #{tpu_custom_call.1} parent=1 // pred_check
      _
    $region31: #{tpu_custom_call.1} parent=1 // pred_check_branch
      %58 = sbr.rel (0) target = $region33
    $region32: #{tpu_custom_call.1} parent=1 // pred_region
      %59 = dma.done [#allocation6], 2048
    $region33: #{tpu_custom_call.1} parent=1 // pred_fallthru
      _
    %v60 = vld [vmem:[#allocation2] sm:$0x3]
    %v61 = vld [vmem:[#allocation5] sm:$0xff]
    %v62 = vld [vmem:[#allocation5 + $0x8] sm:$0xff]
    %v63 = vld [vmem:[#allocation5 + $0x10] sm:$0xff]
    %v64 = vld [vmem:[#allocation5 + $0x18] sm:$0xff]
    %v65 = vld [vmem:[%s2] sm:$0x1]
    %v67 = vlaneseq
    %v68 = vshrl.u32 %v67, 7
    %v69 = vsub.s32 0, %v68
    %v70 = vrot.slane %v65, %v69
    %vm72 = vcmask 261120
    %v74 = vsel %vm72, %v60, 0
    %76 = vmatprep.subr.mxu0 0.0
    %77 = vmatpush1.msra.mxu0 %v61
    %78 = vmatprep.subr.mxu0 0.0
    %79 = vmatpush1.msra.mxu0 %v62
    %80 = vmatprep.subr.mxu0 0.0
    %81 = vmatpush1.msra.mxu0 %v63
    %82 = vmatprep.subr.mxu0 0.0
    %83 = vmatpush1.msra.mxu0 %v64
    %84 = vmatprep.subr.mxu0 0.0
    %85 = vmatpush1.msra.mxu0 0.0
    %86 = vmatprep.subr.mxu0 0.0
    %87 = vmatpush1.msra.mxu0 0.0
    %88 = vmatprep.subr.mxu0 0.0
    %89 = vmatpush1.msra.mxu0 0.0
    %90 = vmatprep.subr.mxu0 0.0
    %91 = vmatpush1.msra.mxu0 0.0
    %92 = vmatprep.subr.mxu0 0.0
    %93 = vmatpush1.msra.mxu0 0.0
    %94 = vmatprep.subr.mxu0 0.0
    %95 = vmatpush1.msra.mxu0 0.0
    %96 = vmatprep.subr.mxu0 0.0
    %97 = vmatpush1.msra.mxu0 0.0
    %98 = vmatprep.subr.mxu0 0.0
    %99 = vmatpush1.msra.mxu0 0.0
    %100 = vmatprep.subr.mxu0 0.0
    %101 = vmatpush1.msra.mxu0 0.0
    %102 = vmatprep.subr.mxu0 0.0
    %103 = vmatpush1.msra.mxu0 0.0
    %104 = vmatprep.subr.mxu0 0.0
    %105 = vmatpush1.msra.mxu0 0.0
    %106 = vmatprep.subr.mxu0 0.0
    %107 = vmatpush1.msra.mxu0 0.0
    %108 = vmatprep.subr.mxu0 0.0
    %109 = vmatpush1.msra.mxu0 0.0
    %110 = vmatprep.subr.mxu0 0.0
    %111 = vmatpush1.msra.mxu0 0.0
    %112 = vmatprep.subr.mxu0 0.0
    %113 = vmatpush1.msra.mxu0 0.0
    %114 = vmatprep.subr.mxu0 0.0
    %115 = vmatpush1.msra.mxu0 0.0
    %116 = vmatprep.subr.mxu0 0.0
    %117 = vmatpush1.msra.mxu0 0.0
    %118 = vmatprep.subr.mxu0 0.0
    %119 = vmatpush1.msra.mxu0 0.0
    %120 = vmatprep.subr.mxu0 0.0
    %121 = vmatpush1.msra.mxu0 0.0
    %122 = vmatprep.subr.mxu0 0.0
    %123 = vmatpush1.msra.mxu0 0.0
    %124 = vmatprep.subr.mxu0 0.0
    %125 = vmatpush1.msra.mxu0 0.0
    %126 = vmatprep.subr.mxu0 0.0
    %127 = vmatpush1.msra.mxu0 0.0
    %128 = vmatprep.subr.mxu0 0.0
    %129 = vmatpush1.msra.mxu0 0.0
    %130 = vmatprep.subr.mxu0 0.0
    %131 = vmatpush1.msra.mxu0 0.0
    %132 = vmatprep.subr.mxu0 0.0
    %133 = vmatpush1.msra.mxu0 0.0
    %134 = vmatprep.subr.mxu0 0.0
    %135 = vmatpush1.msra.mxu0 0.0
    %136 = vmatprep.subr.mxu0 0.0
    %137 = vmatpush1.msra.mxu0 0.0
    %138 = vmatprep.subr.mxu0 0.0
    %139 = vmatpush1.msra.mxu0 0.0
    %140 = vmatprep.mubr.f32.mxu0 0.0
    %141 = vmatmul.mubr.f32.gmra.mrb[0].mxu0 %v74
    %v142 = vpop.f32.mrb[0].mxu0
    %v143 = vadd.f32 %v70, %v142
    %v144 = vpop.f32.mrb[0].mxu0
    %145 = vdwg.mxu0
    %v146 = vld [vmem:[#allocation7] sm:$0xff]
    %v147 = vld [vmem:[#allocation7 + $0x8] sm:$0xff]
    %v148 = vld [vmem:[#allocation7 + $0x10] sm:$0xff]
    %v149 = vld [vmem:[#allocation7 + $0x18] sm:$0xff]
    %v150 = vld [vmem:[#allocation7 + $0x20] sm:$0xff]
    %v151 = vld [vmem:[#allocation7 + $0x28] sm:$0xff]
    %v152 = vld [vmem:[#allocation7 + $0x30] sm:$0xff]
    %v153 = vld [vmem:[#allocation7 + $0x38] sm:$0xff]
    %v154 = vld [vmem:[#allocation7 + $0x40] sm:$0xff]
    %v155 = vld [vmem:[#allocation7 + $0x48] sm:$0xff]
    %v156 = vld [vmem:[#allocation7 + $0x50] sm:$0xff]
    %v157 = vld [vmem:[#allocation7 + $0x58] sm:$0xff]
    %v158 = vld [vmem:[#allocation7 + $0x60] sm:$0xff]
    %v159 = vld [vmem:[#allocation7 + $0x68] sm:$0xff]
    %v160 = vld [vmem:[#allocation7 + $0x70] sm:$0xff]
    %v161 = vld [vmem:[#allocation7 + $0x78] sm:$0xff]
    %v162 = vld [vmem:[%s4] sm:$0xf]
    %v164 = vlaneseq
    %v165 = vshrl.u32 %v164, 7
    %v166 = vsub.s32 0, %v165
    %v167 = vrot.slane %v162, %v166
    %v168 = vlaneseq
    %v169 = vshrl.u32 %v168, 7
    %v170 = vsub.s32 1, %v169
    %v171 = vrot.slane %v162, %v170
    %v172 = vlaneseq
    %v173 = vshrl.u32 %v172, 7
    %v174 = vsub.s32 2, %v173
    %v175 = vrot.slane %v162, %v174
    %v176 = vlaneseq
    %v177 = vshrl.u32 %v176, 7
    %v178 = vsub.s32 3, %v177
    %v179 = vrot.slane %v162, %v178
    %v185 = vsel %vm72, %v143, 0
    %187 = vmatprep.subr.mxu0 %v147
    %188 = vmatpush1.msra.mxu0 %v146
    %189 = vmatprep.subr.mxu0 %v151
    %190 = vmatpush1.msra.mxu0 %v150
    %191 = vmatprep.subr.mxu0 %v155
    %192 = vmatpush1.msra.mxu0 %v154
    %193 = vmatprep.subr.mxu0 %v159
    %194 = vmatpush1.msra.mxu0 %v158
    %195 = vmatprep.subr.mxu0 0.0
    %196 = vmatpush1.msra.mxu0 0.0
    %197 = vmatprep.subr.mxu0 0.0
    %198 = vmatpush1.msra.mxu0 0.0
    %199 = vmatprep.subr.mxu0 0.0
    %200 = vmatpush1.msra.mxu0 0.0
    %201 = vmatprep.subr.mxu0 0.0
    %202 = vmatpush1.msra.mxu0 0.0
    %203 = vmatprep.subr.mxu0 0.0
    %204 = vmatpush1.msra.mxu0 0.0
    %205 = vmatprep.subr.mxu0 0.0
    %206 = vmatpush1.msra.mxu0 0.0
    %207 = vmatprep.subr.mxu0 0.0
    %208 = vmatpush1.msra.mxu0 0.0
    %209 = vmatprep.subr.mxu0 0.0
    %210 = vmatpush1.msra.mxu0 0.0
    %211 = vmatprep.subr.mxu0 0.0
    %212 = vmatpush1.msra.mxu0 0.0
    %213 = vmatprep.subr.mxu0 0.0
    %214 = vmatpush1.msra.mxu0 0.0
    %215 = vmatprep.subr.mxu0 0.0
    %216 = vmatpush1.msra.mxu0 0.0
    %217 = vmatprep.subr.mxu0 0.0
    %218 = vmatpush1.msra.mxu0 0.0
    %219 = vmatprep.subr.mxu0 0.0
    %220 = vmatpush1.msra.mxu0 0.0
    %221 = vmatprep.subr.mxu0 0.0
    %222 = vmatpush1.msra.mxu0 0.0
    %223 = vmatprep.subr.mxu0 0.0
    %224 = vmatpush1.msra.mxu0 0.0
    %225 = vmatprep.subr.mxu0 0.0
    %226 = vmatpush1.msra.mxu0 0.0
    %227 = vmatprep.subr.mxu0 0.0
    %228 = vmatpush1.msra.mxu0 0.0
    %229 = vmatprep.subr.mxu0 0.0
    %230 = vmatpush1.msra.mxu0 0.0
    %231 = vmatprep.subr.mxu0 0.0
    %232 = vmatpush1.msra.mxu0 0.0
    %233 = vmatprep.subr.mxu0 0.0
    %234 = vmatpush1.msra.mxu0 0.0
    %235 = vmatprep.subr.mxu0 0.0
    %236 = vmatpush1.msra.mxu0 0.0
    %237 = vmatprep.subr.mxu0 0.0
    %238 = vmatpush1.msra.mxu0 0.0
    %239 = vmatprep.subr.mxu0 0.0
    %240 = vmatpush1.msra.mxu0 0.0
    %241 = vmatprep.subr.mxu0 0.0
    %242 = vmatpush1.msra.mxu0 0.0
    %243 = vmatprep.subr.mxu0 0.0
    %244 = vmatpush1.msra.mxu0 0.0
    %245 = vmatprep.subr.mxu0 0.0
    %246 = vmatpush1.msra.mxu0 0.0
    %247 = vmatprep.subr.mxu0 0.0
    %248 = vmatpush1.msra.mxu0 0.0
    %249 = vmatprep.subr.mxu0 0.0
    %250 = vmatpush1.msra.mxu0 0.0
    %251 = vmatprep.mubr.f32.mxu0 0.0
    %252 = vmatmul.mubr.f32.gmra.mrb[0].mxu0 %v185
    %v253 = vpop.f32.mrb[0].mxu0
    %v254 = vadd.f32 %v167, %v253
    %v255 = vpop.f32.mrb[0].mxu0
    %v256 = vadd.f32 %v171, %v255
    %257 = vdwg.mxu0
    %258 = vmatprep.subr.mxu0 %v149
    %259 = vmatpush1.msra.mxu0 %v148
    %260 = vmatprep.subr.mxu0 %v153
    %261 = vmatpush1.msra.mxu0 %v152
    %262 = vmatprep.subr.mxu0 %v157
    %263 = vmatpush1.msra.mxu0 %v156
    %264 = vmatprep.subr.mxu0 %v161
    %265 = vmatpush1.msra.mxu0 %v160
    %266 = vmatprep.subr.mxu0 0.0
    %267 = vmatpush1.msra.mxu0 0.0
    %268 = vmatprep.subr.mxu0 0.0
    %269 = vmatpush1.msra.mxu0 0.0
    %270 = vmatprep.subr.mxu0 0.0
    %271 = vmatpush1.msra.mxu0 0.0
    %272 = vmatprep.subr.mxu0 0.0
    %273 = vmatpush1.msra.mxu0 0.0
    %274 = vmatprep.subr.mxu0 0.0
    %275 = vmatpush1.msra.mxu0 0.0
    %276 = vmatprep.subr.mxu0 0.0
    %277 = vmatpush1.msra.mxu0 0.0
    %278 = vmatprep.subr.mxu0 0.0
    %279 = vmatpush1.msra.mxu0 0.0
    %280 = vmatprep.subr.mxu0 0.0
    %281 = vmatpush1.msra.mxu0 0.0
    %282 = vmatprep.subr.mxu0 0.0
    %283 = vmatpush1.msra.mxu0 0.0
    %284 = vmatprep.subr.mxu0 0.0
    %285 = vmatpush1.msra.mxu0 0.0
    %286 = vmatprep.subr.mxu0 0.0
    %287 = vmatpush1.msra.mxu0 0.0
    %288 = vmatprep.subr.mxu0 0.0
    %289 = vmatpush1.msra.mxu0 0.0
    %290 = vmatprep.subr.mxu0 0.0
    %291 = vmatpush1.msra.mxu0 0.0
    %292 = vmatprep.subr.mxu0 0.0
    %293 = vmatpush1.msra.mxu0 0.0
    %294 = vmatprep.subr.mxu0 0.0
    %295 = vmatpush1.msra.mxu0 0.0
    %296 = vmatprep.subr.mxu0 0.0
    %297 = vmatpush1.msra.mxu0 0.0
    %298 = vmatprep.subr.mxu0 0.0
    %299 = vmatpush1.msra.mxu0 0.0
    %300 = vmatprep.subr.mxu0 0.0
    %301 = vmatpush1.msra.mxu0 0.0
    %302 = vmatprep.subr.mxu0 0.0
    %303 = vmatpush1.msra.mxu0 0.0
    %304 = vmatprep.subr.mxu0 0.0
    %305 = vmatpush1.msra.mxu0 0.0
    %306 = vmatprep.subr.mxu0 0.0
    %307 = vmatpush1.msra.mxu0 0.0
    %308 = vmatprep.subr.mxu0 0.0
    %309 = vmatpush1.msra.mxu0 0.0
    %310 = vmatprep.subr.mxu0 0.0
    %311 = vmatpush1.msra.mxu0 0.0
    %312 = vmatprep.subr.mxu0 0.0
    %313 = vmatpush1.msra.mxu0 0.0
    %314 = vmatprep.subr.mxu0 0.0
    %315 = vmatpush1.msra.mxu0 0.0
    %316 = vmatprep.subr.mxu0 0.0
    %317 = vmatpush1.msra.mxu0 0.0
    %318 = vmatprep.subr.mxu0 0.0
    %319 = vmatpush1.msra.mxu0 0.0
    %320 = vmatprep.subr.mxu0 0.0
    %321 = vmatpush1.msra.mxu0 0.0
    %322 = vmatprep.mubr.f32.mxu0 0.0
    %323 = vmatmul.mubr.f32.gmra.mrb[0].mxu0 %v185
    %v324 = vpop.f32.mrb[0].mxu0
    %v325 = vadd.f32 %v175, %v324
    %v326 = vpop.f32.mrb[0].mxu0
    %v327 = vadd.f32 %v179, %v326
    %328 = vdwg.mxu0
    %v329 = vpack.c.bf16 %v254, %v254
    %v330 = vpack.c.bf16 %v256, %v256
    %v331 = vpack.c.bf16 %v325, %v325
    %v332 = vpack.c.bf16 %v327, %v327
    %v337 = vcombine.low %v329, %v330
    %v338 = vcombine.low %v331, %v332
    %v340 = vunpack.c.l.s4 1966171168
    %v341 = vunpack.c.0.s8 %v340
    %v342 = vlaneseq
    %v343 = vshrl.u32 %v342, 7
    %v344 = vsub.s32 %v341, %v343
    %v345 = vrot.slane %v337, %v344
    %v347 = vunpack.c.l.s4 1966171168
    %v348 = vunpack.c.0.s8 %v347
    %v349 = vlaneseq
    %v350 = vshrl.u32 %v349, 7
    %v351 = vsub.s32 %v348, %v350
    %v352 = vrot.slane %v338, %v351
    %v353 = vcombine.low %v345, %v352
    %v355 = vunpack.c.l.s4 1966171168
    %v356 = vunpack.c.0.s8 %v355
    %v357 = vlaneseq
    %v358 = vshrl.u32 %v357, 7
    %v359 = vsub.s32 %v356, %v358
    %v360 = vrot.slane %v353, %v359
    %362 = vst [vmem:[#allocation8] sm:$0xf] %v360
    // Predicated region
    $region34: #{tpu_custom_call.1} parent=1 // pred_check
      _
    $region35: #{tpu_custom_call.1} parent=1 // pred_check_branch
      %364 = sbr.rel (0) target = $region37
    $region36: #{tpu_custom_call.1} parent=1 // pred_region
      %s366 = ssub.s32 64, 64
      %367 = vsyncadd [#allocation4], %s366
      %s369 = sshll.u32 [#allocation8], 4
      %s370 = int_to_ptr.vmem [resolvable:$true] %s369
      %372 = dma.vmem_to_hbm [thread:$0]  %s370, 64, %s5, [#allocation4]
    $region37: #{tpu_custom_call.1} parent=1 // pred_fallthru
      _
    // Predicated region
    $region38: #{tpu_custom_call.1} parent=1 // pred_check
      _
    $region39: #{tpu_custom_call.1} parent=1 // pred_check_branch
      %374 = sbr.rel (0) target = $region41
    $region40: #{tpu_custom_call.1} parent=1 // pred_region
      %375 = dma.done [#allocation4], 64
    $region41: #{tpu_custom_call.1} parent=1 // pred_fallthru
      _
    %376 = vsyncpa [#allocation3], 1
    %377 = vsyncpa [#allocation6], 1
    %378 = vsyncpa [#allocation4], 1

</llo_original>
